<compile_context>
chip_gen: v5e
topology: v5e:2x2
jax: 0.10.0
libtpu: 0.0.40
codegen_flags: <defaults>
</compile_context>

<pallas_src>
import functools

import jax
import jax.numpy as jnp
from jax.experimental import pallas as pl
from jax.experimental.pallas import tpu as pltpu


def _round_up(x, m):
    return (x + m - 1) // m * m


def _make_mlp_kernel(num_layers):
    """Kernel args: (x_ref, w0, b0, w1, b1, ..., w{L-1}, b{L-1}, out_ref)."""

    def kernel(x_ref, *refs):
        out_ref = refs[-1]
        param_refs = refs[:-1]
        h = x_ref[...]                                  # stored dtype
        for l in range(num_layers):
            w_ref = param_refs[2 * l]
            b_ref = param_refs[2 * l + 1]
            # Feed the MXU in the parameter dtype (bf16 stays bf16),
            # accumulate in f32.
            h = jnp.dot(h.astype(w_ref.dtype), w_ref[...],
                        preferred_element_type=jnp.float32)
            h = h + b_ref[...].astype(jnp.float32)      # bias/ReLU in f32
            if l < num_layers - 1:                      # ReLU on all but last
                h = jnp.maximum(h, 0.0)
        out_ref[...] = h.astype(out_ref.dtype)          # single downcast

    return kernel


@functools.partial(jax.jit, static_argnames=("block_rows",))
def mlp_generator_forward(x, weights, biases, *, block_rows=256):
    """Pallas forward pass of MLP_generator.

    x:        (N, input_dim)           any float dtype (f32 / bf16)
    weights:  tuple of (in_dim, out_dim) arrays (layer 0: input->output,
              layers 1..L-1: output->output)
    biases:   tuple of (1, out_dim) arrays
    """
    num_layers = len(weights)
    n, input_dim = x.shape
    output_dim = weights[-1].shape[1]

    # ---- lane-dense padding: every feature dim -> multiple of 128 ----------
    in_pad = _round_up(input_dim, 128)

    # ---- row tile: as large as requested, but keep the grid >= 2 programs
    #      (v7x megacore) and a multiple of 8 sublanes. ----------------------
    br = min(block_rows, _round_up(pl.cdiv(n, 2), 8))
    br = max(8, _round_up(br, 8))
    n_pad = _round_up(n, br)
    grid = n_pad // br

    x_p = jnp.pad(x, ((0, n_pad - n), (0, in_pad - input_dim)))

    in_specs = [pl.BlockSpec((br, in_pad), lambda i: (i, 0))]
    flat_params = []
    prev_pad = in_pad
    for w, b in zip(weights, biases):
        d_in, d_out = w.shape
        d_out_pad = _round_up(d_out, 128)
        w_p = jnp.pad(w, ((0, prev_pad - d_in), (0, d_out_pad - d_out)))
        b_p = jnp.pad(b, ((0, 0), (0, d_out_pad - d_out)))
        flat_params.extend([w_p, b_p])
        in_specs.append(pl.BlockSpec((prev_pad, d_out_pad), lambda i: (0, 0)))
        in_specs.append(pl.BlockSpec((1, d_out_pad), lambda i: (0, 0)))
        prev_pad = d_out_pad

    out_pad = prev_pad
    out_spec = pl.BlockSpec((br, out_pad), lambda i: (i, 0))

    # ---- VMEM budget (BlockSpec double-buffers even constant-index params) --
    param_bytes = sum(p.size * p.dtype.itemsize for p in flat_params)
    act_bytes = br * (in_pad + out_pad) * 4
    est = 2 * param_bytes + 2 * act_bytes + (2 << 20)
    vmem_limit = int(min(est, 64 << 20)) if est > (32 << 20) else None

    kernel = _make_mlp_kernel(num_layers)

    out_p = pl.pallas_call(
        kernel,
        out_shape=jax.ShapeDtypeStruct((n_pad, out_pad), x.dtype),
        grid_spec=pltpu.PrefetchScalarGridSpec(
            num_scalar_prefetch=0,
            grid=(grid,),
            in_specs=in_specs,
            out_specs=out_spec,
        ),
        compiler_params=pltpu.CompilerParams(
            dimension_semantics=("parallel",),
            vmem_limit_bytes=vmem_limit,
        ),
    )(x_p, *flat_params)

    return out_p[:n, :output_dim]


def init_mlp_params(key, input_dim, output_dim, num_layers, dtype=jnp.float32):
    """Deterministic init matching nn.Linear shapes (weights transposed)."""
    weights, biases = [], []
    dims_in = [input_dim] + [output_dim] * (num_layers - 1)
    for d_in in dims_in:
        key, kw, kb = jax.random.split(key, 3)
        bound = 1.0 / jnp.sqrt(jnp.float32(d_in))
        w = jax.random.uniform(kw, (d_in, output_dim), jnp.float32,
                               minval=-bound, maxval=bound).astype(dtype)
        b = jax.random.uniform(kb, (1, output_dim), jnp.float32,
                               minval=-bound, maxval=bound).astype(dtype)
        weights.append(w)
        biases.append(b)
    return tuple(weights), tuple(biases)


def mlp_reference(x, weights, biases):
    """Plain-JAX reference matching the PyTorch forward (f32 math)."""
    h = x.astype(jnp.float32)
    for l in range(len(weights) - 1):
        h = jnp.maximum(h @ weights[l].astype(jnp.float32)
                        + biases[l].astype(jnp.float32), 0.0)
    return h @ weights[-1].astype(jnp.float32) + biases[-1].astype(jnp.float32)


if __name__ == "__main__":
    key = jax.random.PRNGKey(0)
    batch, input_dim, output_dim, num_layers = 16, 32, 32, 3

    k_x, k_p, k_x2 = jax.random.split(key, 3)
    x = jax.random.normal(k_x, (batch, input_dim), jnp.float32)
    weights, biases = init_mlp_params(k_p, input_dim, output_dim, num_layers)

    # f32 path
    out = jax.block_until_ready(mlp_generator_forward(x, weights, biases))
    ref = mlp_reference(x, weights, biases)
    assert out.shape == (batch, output_dim)
    assert jnp.allclose(out, ref, atol=1e-5, rtol=1e-5), "f32 mismatch"

    # Ragged batch (not a multiple of the row tile) exercises pad/slice path.
    x2 = jax.random.normal(k_x2, (37, input_dim), jnp.float32)
    out2 = jax.block_until_ready(mlp_generator_forward(x2, weights, biases))
    ref2 = mlp_reference(x2, weights, biases)
    assert out2.shape == (37, output_dim)
    assert jnp.allclose(out2, ref2, atol=1e-5, rtol=1e-5), "ragged mismatch"

    # bf16 params/activations (native MXU bf16, f32 accumulation) sanity check.
    w_bf, b_bf = jax.tree_util.tree_map(lambda p: p.astype(jnp.bfloat16),
                                        (weights, biases))
    out_bf = jax.block_until_ready(
        mlp_generator_forward(x.astype(jnp.bfloat16), w_bf, b_bf))
    ref_bf = mlp_reference(x.astype(jnp.bfloat16), w_bf, b_bf)
    assert jnp.allclose(out_bf.astype(jnp.float32), ref_bf,
                        atol=2e-2, rtol=2e-2), "bf16 mismatch"

    print("KERNEL_OK")
</pallas_src>

<mosaic_0001>
module attributes {stable_mosaic.version = 11 : i64} {
  func.func @kernel(%arg0: i32, %arg1: memref<8x128xf32, #tpu.memory_space<vmem>>, %arg2: memref<128x128xf32, #tpu.memory_space<vmem>>, %arg3: memref<1x128xf32, #tpu.memory_space<vmem>>, %arg4: memref<128x128xf32, #tpu.memory_space<vmem>>, %arg5: memref<1x128xf32, #tpu.memory_space<vmem>>, %arg6: memref<128x128xf32, #tpu.memory_space<vmem>>, %arg7: memref<1x128xf32, #tpu.memory_space<vmem>>, %arg8: memref<8x128xf32, #tpu.memory_space<vmem>>) attributes {dimension_semantics = [#tpu.dimension_semantics<parallel>], iteration_bounds = array<i64: 2>, scalar_prefetch = 0 : i64, scratch_operands = 0 : i64, tpu.core_type = #tpu.core_type<tc>, window_params = [{transform_indices = @transform_0, window_bounds = array<i64: 8, 128>}, {pipeline_mode = #tpu.pipeline_mode<synchronous>, transform_indices = @transform_1, window_bounds = array<i64: 128, 128>}, {pipeline_mode = #tpu.pipeline_mode<synchronous>, transform_indices = @transform_2, window_bounds = array<i64: 1, 128>}, {pipeline_mode = #tpu.pipeline_mode<synchronous>, transform_indices = @transform_3, window_bounds = array<i64: 128, 128>}, {pipeline_mode = #tpu.pipeline_mode<synchronous>, transform_indices = @transform_4, window_bounds = array<i64: 1, 128>}, {pipeline_mode = #tpu.pipeline_mode<synchronous>, transform_indices = @transform_5, window_bounds = array<i64: 128, 128>}, {pipeline_mode = #tpu.pipeline_mode<synchronous>, transform_indices = @transform_6, window_bounds = array<i64: 1, 128>}, {transform_indices = @transform_7, window_bounds = array<i64: 8, 128>}]} {
    %c0 = arith.constant 0 : index
    %c0_0 = arith.constant 0 : index
    %0 = vector.load %arg1[%c0, %c0_0] : memref<8x128xf32, #tpu.memory_space<vmem>>, vector<8x128xf32>
    %c0_1 = arith.constant 0 : index
    %c0_2 = arith.constant 0 : index
    %1 = vector.load %arg2[%c0_1, %c0_2] : memref<128x128xf32, #tpu.memory_space<vmem>>, vector<128x128xf32>
    %cst = arith.constant dense<0.000000e+00> : vector<8x128xf32>
    %2 = tpu.matmul %0, %1, %cst {dimension_numbers = #tpu.dot_dimension_numbers<[1], [0], [0], [1], [0, 0, 1, 1], [], []>} : vector<8x128xf32>, vector<128x128xf32>, vector<8x128xf32> -> vector<8x128xf32>
    %c0_3 = arith.constant 0 : index
    %c0_4 = arith.constant 0 : index
    %3 = vector.load %arg3[%c0_3, %c0_4] : memref<1x128xf32, #tpu.memory_space<vmem>>, vector<1x128xf32>
    %4 = vector.broadcast %3 : vector<1x128xf32> to vector<8x128xf32>
    %5 = arith.addf %2, %4 : vector<8x128xf32>
    %cst_5 = arith.constant 0.000000e+00 : f32
    %6 = vector.broadcast %cst_5 : f32 to vector<8x128xf32>
    %7 = arith.maximumf %5, %6 : vector<8x128xf32>
    %c0_6 = arith.constant 0 : index
    %c0_7 = arith.constant 0 : index
    %8 = vector.load %arg4[%c0_6, %c0_7] : memref<128x128xf32, #tpu.memory_space<vmem>>, vector<128x128xf32>
    %cst_8 = arith.constant dense<0.000000e+00> : vector<8x128xf32>
    %9 = tpu.matmul %7, %8, %cst_8 {dimension_numbers = #tpu.dot_dimension_numbers<[1], [0], [0], [1], [0, 0, 1, 1], [], []>} : vector<8x128xf32>, vector<128x128xf32>, vector<8x128xf32> -> vector<8x128xf32>
    %c0_9 = arith.constant 0 : index
    %c0_10 = arith.constant 0 : index
    %10 = vector.load %arg5[%c0_9, %c0_10] : memref<1x128xf32, #tpu.memory_space<vmem>>, vector<1x128xf32>
    %11 = vector.broadcast %10 : vector<1x128xf32> to vector<8x128xf32>
    %12 = arith.addf %9, %11 : vector<8x128xf32>
    %cst_11 = arith.constant 0.000000e+00 : f32
    %13 = vector.broadcast %cst_11 : f32 to vector<8x128xf32>
    %14 = arith.maximumf %12, %13 : vector<8x128xf32>
    %c0_12 = arith.constant 0 : index
    %c0_13 = arith.constant 0 : index
    %15 = vector.load %arg6[%c0_12, %c0_13] : memref<128x128xf32, #tpu.memory_space<vmem>>, vector<128x128xf32>
    %cst_14 = arith.constant dense<0.000000e+00> : vector<8x128xf32>
    %16 = tpu.matmul %14, %15, %cst_14 {dimension_numbers = #tpu.dot_dimension_numbers<[1], [0], [0], [1], [0, 0, 1, 1], [], []>} : vector<8x128xf32>, vector<128x128xf32>, vector<8x128xf32> -> vector<8x128xf32>
    %c0_15 = arith.constant 0 : index
    %c0_16 = arith.constant 0 : index
    %17 = vector.load %arg7[%c0_15, %c0_16] : memref<1x128xf32, #tpu.memory_space<vmem>>, vector<1x128xf32>
    %18 = vector.broadcast %17 : vector<1x128xf32> to vector<8x128xf32>
    %19 = arith.addf %16, %18 : vector<8x128xf32>
    %c0_17 = arith.constant 0 : index
    %c0_18 = arith.constant 0 : index
    %20 = vector.load %arg8[%c0_17, %c0_18] : memref<8x128xf32, #tpu.memory_space<vmem>>, vector<8x128xf32>
    tpu.vector_store %arg8[%c0_17, %c0_18], %19 {strides = array<i32>} : memref<8x128xf32, #tpu.memory_space<vmem>>, vector<8x128xf32>,
    return
  }
  func.func @transform_0(%arg0: i32) -> (i32, i32) {
    %c0_i32 = arith.constant 0 : i32
    %c0_i32_0 = arith.constant 0 : i32
    return %arg0, %c0_i32 : i32, i32
  }
  func.func @transform_1(%arg0: i32) -> (i32, i32) {
    %c0_i32 = arith.constant 0 : i32
    %c0_i32_0 = arith.constant 0 : i32
    %c0_i32_1 = arith.constant 0 : i32
    return %c0_i32, %c0_i32_0 : i32, i32
  }
  func.func @transform_2(%arg0: i32) -> (i32, i32) {
    %c0_i32 = arith.constant 0 : i32
    %c0_i32_0 = arith.constant 0 : i32
    %c0_i32_1 = arith.constant 0 : i32
    return %c0_i32, %c0_i32_0 : i32, i32
  }
  func.func @transform_3(%arg0: i32) -> (i32, i32) {
    %c0_i32 = arith.constant 0 : i32
    %c0_i32_0 = arith.constant 0 : i32
    %c0_i32_1 = arith.constant 0 : i32
    return %c0_i32, %c0_i32_0 : i32, i32
  }
  func.func @transform_4(%arg0: i32) -> (i32, i32) {
    %c0_i32 = arith.constant 0 : i32
    %c0_i32_0 = arith.constant 0 : i32
    %c0_i32_1 = arith.constant 0 : i32
    return %c0_i32, %c0_i32_0 : i32, i32
  }
  func.func @transform_5(%arg0: i32) -> (i32, i32) {
    %c0_i32 = arith.constant 0 : i32
    %c0_i32_0 = arith.constant 0 : i32
    %c0_i32_1 = arith.constant 0 : i32
    return %c0_i32, %c0_i32_0 : i32, i32
  }
  func.func @transform_6(%arg0: i32) -> (i32, i32) {
    %c0_i32 = arith.constant 0 : i32
    %c0_i32_0 = arith.constant 0 : i32
    %c0_i32_1 = arith.constant 0 : i32
    return %c0_i32, %c0_i32_0 : i32, i32
  }
  func.func @transform_7(%arg0: i32) -> (i32, i32) {
    %c0_i32 = arith.constant 0 : i32
    %c0_i32_0 = arith.constant 0 : i32
    return %arg0, %c0_i32 : i32, i32
  }
}

</mosaic_0001>

<llo_original>
// kernel: mlp_generator_forward.1
$region0: #{mlp_generator_forward.1}
  #allocation0 [shape = 'u32[]', space=smem, size = 0x4, offset = 0x4, fixed_abs, tag = 'smem constant byte address 0x4 - core index']
  #allocation1 [shape = 'u32[72,128]{1,0:T(1,128)}', space=vmem, size = 0x9000, scoped, tag = 'internal scratch']
  %s0 = inlined_call_operand.vmem [shape: f32[16,128], index: 0, kind: input, shape index: {}]
  %s1 = inlined_call_operand.vmem [shape: f32[128,128], index: 1, kind: input, shape index: {}]
  %s2 = inlined_call_operand.vmem [shape: f32[1,128], index: 2, kind: input, shape index: {}]
  %s3 = inlined_call_operand.vmem [shape: f32[128,128], index: 3, kind: input, shape index: {}]
  %s4 = inlined_call_operand.vmem [shape: f32[1,128], index: 4, kind: input, shape index: {}]
  %s5 = inlined_call_operand.vmem [shape: f32[128,128], index: 5, kind: input, shape index: {}]
  %s6 = inlined_call_operand.vmem [shape: f32[1,128], index: 6, kind: input, shape index: {}]
  %s7 = inlined_call_operand.hbm [shape: f32[16,128], index: 7, kind: output, shape index: {}]
  %s8 = sld [smem:[#allocation0]]
  $region61: #{mlp_generator_forward.1} parent=0
    _
  %s10 = ssub.s32 1, %s8
  %s11 = scalar_select 0, %s10, %s8
  $region1: #{mlp_generator_forward.1} parent=0
    #allocation2 [shape = 'u8[8192]{0}', space=vmem, size = 0x2000, scoped, tag = 'output window, operand 0']
    #allocation3 [shape = 's32[2]{0}', space=sflag, size = 0x8, scoped, tag = 'scoped memory for mlp_generator_forward.1']
    %12 = vsyncpa [#allocation3], 0
    %s13 = scalar_lea.sflag [#allocation3], 1
    %14 = vsyncpa %s13, 0
    loop: start=0, step=1, limit=4
    $region2: #{mlp_generator_forward.1} parent=1 // loop_pre_header
      _
    $region3: #{mlp_generator_forward.1} parent=1 // loop_header
      %s16 = sphi 0, %s20
      %p17 = scmp.ge.s32.totalorder %s16, 4
      %s26 = sphi 0, %s28
      %s29 = sphi 0, %s26
      %s30 = sphi 0, %s29
      %s46 = sphi 0, %s30
      %s50 = sphi 0, %s50
      %s52 = sphi 0, %s50
      %s53 = sphi 0, %s52
      %s67 = sphi 0, %s53
      %s71 = sphi 0, %s71
      %s73 = sphi 0, %s71
      %s74 = sphi 0, %s73
      %s88 = sphi 0, %s74
      %s92 = sphi 0, %s92
      %s94 = sphi 0, %s92
      %s95 = sphi 0, %s94
      %s109 = sphi 0, %s95
      %s113 = sphi 0, %s113
      %s115 = sphi 0, %s113
      %s116 = sphi 0, %s115
      %s130 = sphi 0, %s116
      %s134 = sphi 0, %s134
      %s136 = sphi 0, %s134
      %s137 = sphi 0, %s136
      %s151 = sphi 0, %s137
      %s155 = sphi 0, %s155
      %s157 = sphi 0, %s155
      %s158 = sphi 0, %s157
      %s172 = sphi 0, %s158
      %s178 = sphi 0, %s180
      %s181 = sphi 0, %s178
      %s182 = sphi 0, %s181
      %s198 = sphi 0, %s182
    $region4: #{mlp_generator_forward.1} parent=1 // loop_header_branch
      %19 = sbr.rel (%p17) target = $region8
    $region5: #{mlp_generator_forward.1} parent=1 // loop_body
      %s21 = ssub.s32 %s16, 1
      %s22 = ssub.s32 %s16, 2
      %s23 = sadd.s32 %s16, 1
      %s24 = ssub.s32 %s16, %s23
      %p25 = scmp.eq.s32.totalorder %s24, 0
      %s27 = sadd.s32 %s26, 1
      %s28 = scalar_select %p25, %s26, %s27
      %p31 = pneg %p25
      %p32 = scmp.eq.s32.totalorder %s16, 1
      %p33 = por %p31, %p32
      %p34 = scmp.ne.s32.totalorder %s26, %s29
      %p35 = scmp.eq.s32.totalorder %s16, 0
      %p36 = por %p34, %p35
      %p37 = scmp.ne.s32.totalorder %s26, %s29
      %p38 = scmp.eq.s32.totalorder %s21, 1
      %p39 = por %p37, %p38
      %p40 = scmp.ne.s32.totalorder %s29, %s30
      %p41 = scmp.eq.s32.totalorder %s21, 0
      %p42 = por %p40, %p41
      %p43 = scmp.ne.s32.totalorder %s29, %s30
      %p44 = scmp.eq.s32.totalorder %s22, 1
      %p45 = por %p43, %p44
      %p47 = scmp.ne.s32.totalorder %s30, %s46
      %p48 = scmp.eq.s32.totalorder %s22, 0
      %p49 = por %p47, %p48
      %s51 = sadd.s32 %s50, 1
      %p54 = scmp.eq.s32.totalorder %s16, 1
      %p55 = scmp.ne.s32.totalorder %s50, %s52
      %p56 = scmp.eq.s32.totalorder %s16, 0
      %p57 = por %p55, %p56
      %p58 = scmp.ne.s32.totalorder %s50, %s52
      %p59 = scmp.eq.s32.totalorder %s21, 1
      %p60 = por %p58, %p59
      %p61 = scmp.ne.s32.totalorder %s52, %s53
      %p62 = scmp.eq.s32.totalorder %s21, 0
      %p63 = por %p61, %p62
      %p64 = scmp.ne.s32.totalorder %s52, %s53
      %p65 = scmp.eq.s32.totalorder %s22, 1
      %p66 = por %p64, %p65
      %p68 = scmp.ne.s32.totalorder %s53, %s67
      %p69 = scmp.eq.s32.totalorder %s22, 0
      %p70 = por %p68, %p69
      %s72 = sadd.s32 %s71, 1
      %p75 = scmp.eq.s32.totalorder %s16, 1
      %p76 = scmp.ne.s32.totalorder %s71, %s73
      %p77 = scmp.eq.s32.totalorder %s16, 0
      %p78 = por %p76, %p77
      %p79 = scmp.ne.s32.totalorder %s71, %s73
      %p80 = scmp.eq.s32.totalorder %s21, 1
      %p81 = por %p79, %p80
      %p82 = scmp.ne.s32.totalorder %s73, %s74
      %p83 = scmp.eq.s32.totalorder %s21, 0
      %p84 = por %p82, %p83
      %p85 = scmp.ne.s32.totalorder %s73, %s74
      %p86 = scmp.eq.s32.totalorder %s22, 1
      %p87 = por %p85, %p86
      %p89 = scmp.ne.s32.totalorder %s74, %s88
      %p90 = scmp.eq.s32.totalorder %s22, 0
      %p91 = por %p89, %p90
      %s93 = sadd.s32 %s92, 1
      %p96 = scmp.eq.s32.totalorder %s16, 1
      %p97 = scmp.ne.s32.totalorder %s92, %s94
      %p98 = scmp.eq.s32.totalorder %s16, 0
      %p99 = por %p97, %p98
      %p100 = scmp.ne.s32.totalorder %s92, %s94
      %p101 = scmp.eq.s32.totalorder %s21, 1
      %p102 = por %p100, %p101
      %p103 = scmp.ne.s32.totalorder %s94, %s95
      %p104 = scmp.eq.s32.totalorder %s21, 0
      %p105 = por %p103, %p104
      %p106 = scmp.ne.s32.totalorder %s94, %s95
      %p107 = scmp.eq.s32.totalorder %s22, 1
      %p108 = por %p106, %p107
      %p110 = scmp.ne.s32.totalorder %s95, %s109
      %p111 = scmp.eq.s32.totalorder %s22, 0
      %p112 = por %p110, %p111
      %s114 = sadd.s32 %s113, 1
      %p117 = scmp.eq.s32.totalorder %s16, 1
      %p118 = scmp.ne.s32.totalorder %s113, %s115
      %p119 = scmp.eq.s32.totalorder %s16, 0
      %p120 = por %p118, %p119
      %p121 = scmp.ne.s32.totalorder %s113, %s115
      %p122 = scmp.eq.s32.totalorder %s21, 1
      %p123 = por %p121, %p122
      %p124 = scmp.ne.s32.totalorder %s115, %s116
      %p125 = scmp.eq.s32.totalorder %s21, 0
      %p126 = por %p124, %p125
      %p127 = scmp.ne.s32.totalorder %s115, %s116
      %p128 = scmp.eq.s32.totalorder %s22, 1
      %p129 = por %p127, %p128
      %p131 = scmp.ne.s32.totalorder %s116, %s130
      %p132 = scmp.eq.s32.totalorder %s22, 0
      %p133 = por %p131, %p132
      %s135 = sadd.s32 %s134, 1
      %p138 = scmp.eq.s32.totalorder %s16, 1
      %p139 = scmp.ne.s32.totalorder %s134, %s136
      %p140 = scmp.eq.s32.totalorder %s16, 0
      %p141 = por %p139, %p140
      %p142 = scmp.ne.s32.totalorder %s134, %s136
      %p143 = scmp.eq.s32.totalorder %s21, 1
      %p144 = por %p142, %p143
      %p145 = scmp.ne.s32.totalorder %s136, %s137
      %p146 = scmp.eq.s32.totalorder %s21, 0
      %p147 = por %p145, %p146
      %p148 = scmp.ne.s32.totalorder %s136, %s137
      %p149 = scmp.eq.s32.totalorder %s22, 1
      %p150 = por %p148, %p149
      %p152 = scmp.ne.s32.totalorder %s137, %s151
      %p153 = scmp.eq.s32.totalorder %s22, 0
      %p154 = por %p152, %p153
      %s156 = sadd.s32 %s155, 1
      %p159 = scmp.eq.s32.totalorder %s16, 1
      %p160 = scmp.ne.s32.totalorder %s155, %s157
      %p161 = scmp.eq.s32.totalorder %s16, 0
      %p162 = por %p160, %p161
      %p163 = scmp.ne.s32.totalorder %s155, %s157
      %p164 = scmp.eq.s32.totalorder %s21, 1
      %p165 = por %p163, %p164
      %p166 = scmp.ne.s32.totalorder %s157, %s158
      %p167 = scmp.eq.s32.totalorder %s21, 0
      %p168 = por %p166, %p167
      %p169 = scmp.ne.s32.totalorder %s157, %s158
      %p170 = scmp.eq.s32.totalorder %s22, 1
      %p171 = por %p169, %p170
      %p173 = scmp.ne.s32.totalorder %s158, %s172
      %p174 = scmp.eq.s32.totalorder %s22, 0
      %p175 = por %p173, %p174
      %s176 = ssub.s32 %s16, %s23
      %p177 = scmp.eq.s32.totalorder %s176, 0
      %s179 = sadd.s32 %s178, 1
      %s180 = scalar_select %p177, %s178, %s179
      %p183 = pneg %p177
      %p184 = scmp.eq.s32.totalorder %s16, 1
      %p185 = por %p183, %p184
      %p186 = scmp.ne.s32.totalorder %s178, %s181
      %p187 = scmp.eq.s32.totalorder %s16, 0
      %p188 = por %p186, %p187
      %p189 = scmp.ne.s32.totalorder %s178, %s181
      %p190 = scmp.eq.s32.totalorder %s21, 1
      %p191 = por %p189, %p190
      %p192 = scmp.ne.s32.totalorder %s181, %s182
      %p193 = scmp.eq.s32.totalorder %s21, 0
      %p194 = por %p192, %p193
      %p195 = scmp.ne.s32.totalorder %s181, %s182
      %p196 = scmp.eq.s32.totalorder %s22, 1
      %p197 = por %p195, %p196
      %p199 = scmp.ne.s32.totalorder %s182, %s198
      %p200 = scmp.eq.s32.totalorder %s22, 0
      %p201 = por %p199, %p200
      %p202 = scmp.le.s32.totalorder 1, %s16
      %p203 = scmp.lt.s32.totalorder %s16, 3
      %p204 = pnand %p202, %p203
      %p205 = pneg %p204
      // Predicated region
      $region9: #{mlp_generator_forward.1} parent=5 // pred_check
        _
      $region10: #{mlp_generator_forward.1} parent=5 // pred_check_branch
        %207 = sbr.rel (%p204) target = $region12
      $region11: #{mlp_generator_forward.1} parent=5 // pred_region
        %s208 = ssub.s32 %s16, 1
        // Predicated region
        $region13: #{mlp_generator_forward.1} parent=11 // pred_check
          %p209 = pneg %p63
        $region14: #{mlp_generator_forward.1} parent=11 // pred_check_branch
          %211 = sbr.rel (%p209) target = $region16
        $region15: #{mlp_generator_forward.1} parent=11 // pred_region
          _
        $region16: #{mlp_generator_forward.1} parent=11 // pred_fallthru
          _
        // Predicated region
        $region17: #{mlp_generator_forward.1} parent=11 // pred_check
          %p212 = pneg %p84
        $region18: #{mlp_generator_forward.1} parent=11 // pred_check_branch
          %214 = sbr.rel (%p212) target = $region20
        $region19: #{mlp_generator_forward.1} parent=11 // pred_region
          _
        $region20: #{mlp_generator_forward.1} parent=11 // pred_fallthru
          _
        // Predicated region
        $region21: #{mlp_generator_forward.1} parent=11 // pred_check
          %p215 = pneg %p105
        $region22: #{mlp_generator_forward.1} parent=11 // pred_check_branch
          %217 = sbr.rel (%p215) target = $region24
        $region23: #{mlp_generator_forward.1} parent=11 // pred_region
          _
        $region24: #{mlp_generator_forward.1} parent=11 // pred_fallthru
          _
        // Predicated region
        $region25: #{mlp_generator_forward.1} parent=11 // pred_check
          %p218 = pneg %p126
        $region26: #{mlp_generator_forward.1} parent=11 // pred_check_branch
          %220 = sbr.rel (%p218) target = $region28
        $region27: #{mlp_generator_forward.1} parent=11 // pred_region
          _
        $region28: #{mlp_generator_forward.1} parent=11 // pred_fallthru
          _
        // Predicated region
        $region29: #{mlp_generator_forward.1} parent=11 // pred_check
          %p221 = pneg %p147
        $region30: #{mlp_generator_forward.1} parent=11 // pred_check_branch
          %223 = sbr.rel (%p221) target = $region32
        $region31: #{mlp_generator_forward.1} parent=11 // pred_region
          _
        $region32: #{mlp_generator_forward.1} parent=11 // pred_fallthru
          _
        // Predicated region
        $region33: #{mlp_generator_forward.1} parent=11 // pred_check
          %p224 = pneg %p168
        $region34: #{mlp_generator_forward.1} parent=11 // pred_check_branch
          %226 = sbr.rel (%p224) target = $region36
        $region35: #{mlp_generator_forward.1} parent=11 // pred_region
          _
        $region36: #{mlp_generator_forward.1} parent=11 // pred_fallthru
          _
      $region12: #{mlp_generator_forward.1} parent=5 // pred_fallthru
        _
      %p227 = scmp.lt.s32.totalorder %s16, 2
      // Predicated region
      $region37: #{mlp_generator_forward.1} parent=5 // pred_check
        %p228 = pneg %p227
      $region38: #{mlp_generator_forward.1} parent=5 // pred_check_branch
        %230 = sbr.rel (%p228) target = $region40
      $region39: #{mlp_generator_forward.1} parent=5 // pred_region
        // Predicated region
        $region41: #{mlp_generator_forward.1} parent=39 // pred_check
          %p231 = pneg %p36
        $region42: #{mlp_generator_forward.1} parent=39 // pred_check_branch
          %233 = sbr.rel (%p231) target = $region44
        $region43: #{mlp_generator_forward.1} parent=39 // pred_region
          %p234 = scmp.lt.s32.totalorder %s16, 1
          %s235 = scalar_select %p234, %s16, 1
          %s236 = smul.addr %s235, 8
          %s237 = scalar_lea.vmem %s0, %s236
        $region44: #{mlp_generator_forward.1} parent=39 // pred_fallthru
          _
      $region40: #{mlp_generator_forward.1} parent=5 // pred_fallthru
        _
      %p238 = scmp.le.s32.totalorder 1, %s16
      %p239 = scmp.lt.s32.totalorder %s16, 3
      %p240 = pnand %p238, %p239
      %p241 = pneg %p240
      // Predicated region
      $region45: #{mlp_generator_forward.1} parent=5 // pred_check
        _
      $region46: #{mlp_generator_forward.1} parent=5 // pred_check_branch
        %243 = sbr.rel (%p240) target = $region48
      $region47: #{mlp_generator_forward.1} parent=5 // pred_region
        %s244 = ssub.s32 %s16, 1
        %p245 = scmp.lt.s32.totalorder %s21, 1
        %s246 = scalar_select %p245, %s21, 1
        %s247 = smul.addr %s246, 8
        %s248 = scalar_lea.vmem %s0, %s247
        %p249 = pneg %p42
        %p250 = pneg %p39
        %p251 = pneg %p63
        %p252 = pneg %p60
        %p253 = pneg %p84
        %p254 = pneg %p81
        %p255 = pneg %p105
        %p256 = pneg %p102
        %p257 = pneg %p126
        %p258 = pneg %p123
        %p259 = pneg %p147
        %p260 = pneg %p144
        %p261 = pneg %p168
        %p262 = pneg %p165
        %p263 = pneg %p194
        %p264 = pneg %p191
        %s265 = sand.u32 %s181, 1
        %s266 = scalar_lea.sflag [#allocation3], %s265
        %s267 = sand.u32 %s181, 1
        %s268 = smul.addr %s267, 8
        %s269 = scalar_lea.vmem [#allocation2], %s268
        %p270 = scmp.lt.s32.totalorder %s21, 1
        %s271 = scalar_select %p270, %s21, 1
        %s272 = smul.addr %s271, 8
        %s273 = scalar_lea.vmem %s0, %s272
        %v274 = vld [vmem:[%s273] sm:$0xff]
        %v275 = vld [vmem:[%s1] sm:$0xff]
        %v276 = vld [vmem:[%s1 + $0x8] sm:$0xff]
        %v277 = vld [vmem:[%s1 + $0x10] sm:$0xff]
        %v278 = vld [vmem:[%s1 + $0x18] sm:$0xff]
        %v279 = vld [vmem:[%s1 + $0x20] sm:$0xff]
        %v280 = vld [vmem:[%s1 + $0x28] sm:$0xff]
        %v281 = vld [vmem:[%s1 + $0x30] sm:$0xff]
        %v282 = vld [vmem:[%s1 + $0x38] sm:$0xff]
        %v283 = vld [vmem:[%s1 + $0x40] sm:$0xff]
        %v284 = vld [vmem:[%s1 + $0x48] sm:$0xff]
        %v285 = vld [vmem:[%s1 + $0x50] sm:$0xff]
        %v286 = vld [vmem:[%s1 + $0x58] sm:$0xff]
        %v287 = vld [vmem:[%s1 + $0x60] sm:$0xff]
        %v288 = vld [vmem:[%s1 + $0x68] sm:$0xff]
        %v289 = vld [vmem:[%s1 + $0x70] sm:$0xff]
        %v290 = vld [vmem:[%s1 + $0x78] sm:$0xff]
        %v291 = vld [vmem:[%s2] sm:$0x1]
        %v293 = vperm.slane %v291, 0
        %295 = vmatpush.msra.mxu0 %v290
        %296 = vmatpush.msra.mxu0 %v289
        %297 = vmatpush.msra.mxu0 %v288
        %298 = vmatpush.msra.mxu0 %v287
        %299 = vmatpush.msra.mxu0 %v286
        %300 = vmatpush.msra.mxu0 %v285
        %301 = vmatpush.msra.mxu0 %v284
        %302 = vmatpush.msra.mxu0 %v283
        %303 = vmatpush.msra.mxu0 %v282
        %304 = vmatpush.msra.mxu0 %v281
        %305 = vmatpush.msra.mxu0 %v280
        %306 = vmatpush.msra.mxu0 %v279
        %307 = vmatpush.msra.mxu0 %v278
        %308 = vmatpush.msra.mxu0 %v277
        %309 = vmatpush.msra.mxu0 %v276
        %310 = vmatpush.msra.mxu0 %v275
        %311 = vmatmul.f32.gmra.mxu0 %v274
        %v312 = vpop.f32.mrf.mxu0
        %v313 = vadd.f32 %v293, %v312
        %314 = vdwg.mxu0
        %v315 = vmax.f32 %v313, 0.0
        %v316 = vld [vmem:[%s3] sm:$0xff]
        %v317 = vld [vmem:[%s3 + $0x8] sm:$0xff]
        %v318 = vld [vmem:[%s3 + $0x10] sm:$0xff]
        %v319 = vld [vmem:[%s3 + $0x18] sm:$0xff]
        %v320 = vld [vmem:[%s3 + $0x20] sm:$0xff]
        %v321 = vld [vmem:[%s3 + $0x28] sm:$0xff]
        %v322 = vld [vmem:[%s3 + $0x30] sm:$0xff]
        %v323 = vld [vmem:[%s3 + $0x38] sm:$0xff]
        %v324 = vld [vmem:[%s3 + $0x40] sm:$0xff]
        %v325 = vld [vmem:[%s3 + $0x48] sm:$0xff]
        %v326 = vld [vmem:[%s3 + $0x50] sm:$0xff]
        %v327 = vld [vmem:[%s3 + $0x58] sm:$0xff]
        %v328 = vld [vmem:[%s3 + $0x60] sm:$0xff]
        %v329 = vld [vmem:[%s3 + $0x68] sm:$0xff]
        %v330 = vld [vmem:[%s3 + $0x70] sm:$0xff]
        %v331 = vld [vmem:[%s3 + $0x78] sm:$0xff]
        %v332 = vld [vmem:[%s4] sm:$0x1]
        %v334 = vperm.slane %v332, 0
        %336 = vmatpush.msra.mxu0 %v331
        %337 = vmatpush.msra.mxu0 %v330
        %338 = vmatpush.msra.mxu0 %v329
        %339 = vmatpush.msra.mxu0 %v328
        %340 = vmatpush.msra.mxu0 %v327
        %341 = vmatpush.msra.mxu0 %v326
        %342 = vmatpush.msra.mxu0 %v325
        %343 = vmatpush.msra.mxu0 %v324
        %344 = vmatpush.msra.mxu0 %v323
        %345 = vmatpush.msra.mxu0 %v322
        %346 = vmatpush.msra.mxu0 %v321
        %347 = vmatpush.msra.mxu0 %v320
        %348 = vmatpush.msra.mxu0 %v319
        %349 = vmatpush.msra.mxu0 %v318
        %350 = vmatpush.msra.mxu0 %v317
        %351 = vmatpush.msra.mxu0 %v316
        %352 = vmatmul.f32.gmra.mxu0 %v315
        %v353 = vpop.f32.mrf.mxu0
        %v354 = vadd.f32 %v334, %v353
        %355 = vdwg.mxu0
        %v356 = vmax.f32 %v354, 0.0
        %v357 = vld [vmem:[%s5] sm:$0xff]
        %v358 = vld [vmem:[%s5 + $0x8] sm:$0xff]
        %v359 = vld [vmem:[%s5 + $0x10] sm:$0xff]
        %v360 = vld [vmem:[%s5 + $0x18] sm:$0xff]
        %v361 = vld [vmem:[%s5 + $0x20] sm:$0xff]
        %v362 = vld [vmem:[%s5 + $0x28] sm:$0xff]
        %v363 = vld [vmem:[%s5 + $0x30] sm:$0xff]
        %v364 = vld [vmem:[%s5 + $0x38] sm:$0xff]
        %v365 = vld [vmem:[%s5 + $0x40] sm:$0xff]
        %v366 = vld [vmem:[%s5 + $0x48] sm:$0xff]
        %v367 = vld [vmem:[%s5 + $0x50] sm:$0xff]
        %v368 = vld [vmem:[%s5 + $0x58] sm:$0xff]
        %v369 = vld [vmem:[%s5 + $0x60] sm:$0xff]
        %v370 = vld [vmem:[%s5 + $0x68] sm:$0xff]
        %v371 = vld [vmem:[%s5 + $0x70] sm:$0xff]
        %v372 = vld [vmem:[%s5 + $0x78] sm:$0xff]
        %v373 = vld [vmem:[%s6] sm:$0x1]
        %v375 = vperm.slane %v373, 0
        %377 = vmatpush.msra.mxu0 %v372
        %378 = vmatpush.msra.mxu0 %v371
        %379 = vmatpush.msra.mxu0 %v370
        %380 = vmatpush.msra.mxu0 %v369
        %381 = vmatpush.msra.mxu0 %v368
        %382 = vmatpush.msra.mxu0 %v367
        %383 = vmatpush.msra.mxu0 %v366
        %384 = vmatpush.msra.mxu0 %v365
        %385 = vmatpush.msra.mxu0 %v364
        %386 = vmatpush.msra.mxu0 %v363
        %387 = vmatpush.msra.mxu0 %v362
        %388 = vmatpush.msra.mxu0 %v361
        %389 = vmatpush.msra.mxu0 %v360
        %390 = vmatpush.msra.mxu0 %v359
        %391 = vmatpush.msra.mxu0 %v358
        %392 = vmatpush.msra.mxu0 %v357
        %393 = vmatmul.f32.gmra.mxu0 %v356
        %v394 = vpop.f32.mrf.mxu0
        %v395 = vadd.f32 %v375, %v394
        %396 = vdwg.mxu0
        %397 = vst [vmem:[%s269] sm:$0xff] %v395
        %s398 = sand.u32 %s181, 1
        %s399 = scalar_lea.sflag [#allocation3], %s398
        %s400 = sand.u32 %s181, 1
        %s401 = smul.addr %s400, 8
        %s402 = scalar_lea.vmem [#allocation2], %s401
        // Predicated region
        $region49: #{mlp_generator_forward.1} parent=47 // pred_check
          %p403 = pneg %p191
        $region50: #{mlp_generator_forward.1} parent=47 // pred_check_branch
          %405 = sbr.rel (%p403) target = $region52
        $region51: #{mlp_generator_forward.1} parent=47 // pred_region
          %407 = vsyncadd %s399, 0
          %s408 = smul.addr %s21, 8
          %s409 = scalar_lea.hbm %s7, %s408
          %s411 = sshll.u32 %s402, 4
          %s412 = int_to_ptr.vmem [resolvable:$true] %s411
          %s413 = sshll.u32 %s409, 4
          %s414 = int_to_ptr.hbm [resolvable:$true] %s413
          %416 = dma.vmem_to_hbm [thread:$0]  %s412, 128, %s414, %s399
        $region52: #{mlp_generator_forward.1} parent=47 // pred_fallthru
          _
      $region48: #{mlp_generator_forward.1} parent=5 // pred_fallthru
        _
      %p417 = scmp.le.s32.totalorder 2, %s16
      // Predicated region
      $region53: #{mlp_generator_forward.1} parent=5 // pred_check
        %p418 = pneg %p417
      $region54: #{mlp_generator_forward.1} parent=5 // pred_check_branch
        %420 = sbr.rel (%p418) target = $region56
      $region55: #{mlp_generator_forward.1} parent=5 // pred_region
        %s421 = ssub.s32 %s16, 2
        // Predicated region
        $region57: #{mlp_generator_forward.1} parent=55 // pred_check
          %p422 = pneg %p197
        $region58: #{mlp_generator_forward.1} parent=55 // pred_check_branch
          %424 = sbr.rel (%p422) target = $region60
        $region59: #{mlp_generator_forward.1} parent=55 // pred_region
          %s425 = sand.u32 %s182, 1
          %s426 = scalar_lea.sflag [#allocation3], %s425
          %s427 = sand.u32 %s182, 1
          %s428 = smul.addr %s427, 8
          %s429 = scalar_lea.vmem [#allocation2], %s428
          %431 = dma.done %s426, 128
        $region60: #{mlp_generator_forward.1} parent=55 // pred_fallthru
          _
      $region56: #{mlp_generator_forward.1} parent=5 // pred_fallthru
        _
    $region6: #{mlp_generator_forward.1} parent=1 // loop_footer
      %s20 = sadd.s32 1, %s16
    $region7: #{mlp_generator_forward.1} parent=1 // loop_footer_branch
      %15 = sbr.rel target = $region3
    $region8: #{mlp_generator_forward.1} parent=1 // loop_exit
      _
    %432 = vsyncpa [#allocation3], 1
    %s433 = scalar_lea.sflag [#allocation3], 1
    %434 = vsyncpa %s433, 1

</llo_original>
